<compile_context>
chip_gen: v6e
topology: v6e:2x2x1
jax: 0.10.0
libtpu: 0.0.40
codegen_flags: <defaults>
</compile_context>

<pallas_src>
import math

import jax
import jax.numpy as jnp
from jax.experimental import pallas as pl
from jax.experimental.pallas import tpu as pltpu


def _round_up(n, m):
    return ((n + m - 1) // m) * m


def _proposal_categorical_kernel(x_ref, w1_ref, b1_ref, w2_ref, b2_ref, out_ref):
    x = x_ref[...].astype(jnp.float32)               # (TB, d_in)

    # lin1 + relu
    h = jnp.dot(x, w1_ref[...], preferred_element_type=jnp.float32) + b1_ref[...]
    h = jnp.maximum(h, 0.0)                           # (TB, d_in)

    # lin2
    logits = jnp.dot(h, w2_ref[...], preferred_element_type=jnp.float32) + b2_ref[...]

    # Numerically stable softmax along the feature axis (dim=1).
    m = jnp.max(logits, axis=1, keepdims=True)
    e = jnp.exp(logits - m)
    denom = jnp.sum(e, axis=1, keepdims=True)         # >= 1 by construction
    r = pl.reciprocal(denom, approx=True)             # EUP vrcp (free slot)
    r = r * (2.0 - denom * r)                         # one Newton step -> ~f32 exact
    out_ref[...] = (e * r).astype(out_ref.dtype)


def _derive_batch_tile(batch, d_in, d_out, block_b, vmem_budget_bytes):
    """Rows per grid step, derived from a VMEM budget.

    Per-row VMEM cost is lane-padded (last dim pads to 128 lanes): the
    double-buffered x and out blocks plus the f32 compute temporaries
    (h / logits / e) cost roughly 3 * (pad(d_in) + pad(d_out)) * 4 bytes/row.
    """
    lane_in = _round_up(d_in, 128)
    lane_out = _round_up(d_out, 128)
    bytes_per_row = 4 * 3 * (lane_in + lane_out)
    max_tb = max(8, (vmem_budget_bytes // bytes_per_row) // 8 * 8)

    if batch <= 8:
        return batch                       # single block equal to the full dim

    tb = min(block_b, max_tb, _round_up(batch, 8))
    tb = max(8, (tb // 8) * 8)
    # Prefer >= 2 grid steps so the "parallel" batch axis can shard across
    # v7x's two TensorCores (and exercises the partial-tail path).
    if pl.cdiv(batch, tb) < 2:
        tb = max(8, _round_up(pl.cdiv(batch, 2), 8))
    return tb


def proposal_categorical_forward(x, w1_t, b1, w2_t, b2, *, block_b=4096,
                                 io_dtype=None,
                                 vmem_budget_bytes=12 * 1024 * 1024):
    """x: (B, D_in); w1_t: (D_in, D_in); b1: (1, D_in); w2_t: (D_in, D_out);
    b2: (1, D_out).  Returns softmax probabilities (B, D_out), i.e. the
    `probs` of the Categorical distribution."""
    batch, d_in = x.shape
    d_out = w2_t.shape[1]

    # Parameters stay f32 and VMEM-resident; they are tiny.
    w1_t = w1_t.astype(jnp.float32)
    w2_t = w2_t.astype(jnp.float32)
    b1 = b1.reshape(1, d_in).astype(jnp.float32)
    b2 = b2.reshape(1, d_out).astype(jnp.float32)

    # Optional reduced-precision streaming of the two big HBM streams
    # (x in, probs out).  Default f32 to meet the 1e-5 reference tolerance.
    if io_dtype is None:
        io_dtype = jnp.float32
    x = x.astype(io_dtype)

    tb = _derive_batch_tile(batch, d_in, d_out, block_b, vmem_budget_bytes)
    grid = (pl.cdiv(batch, tb),)   # no padding: Pallas handles the partial tail

    out = pl.pallas_call(
        _proposal_categorical_kernel,
        out_shape=jax.ShapeDtypeStruct((batch, d_out), io_dtype),
        grid_spec=pltpu.PrefetchScalarGridSpec(
            num_scalar_prefetch=0,
            grid=grid,
            in_specs=[
                # x: tiled along the batch axis -> double-buffer pipelined.
                pl.BlockSpec((tb, d_in), lambda i: (i, 0)),
                # parameters: constant block index -> resident in VMEM.
                pl.BlockSpec((d_in, d_in), lambda i: (0, 0)),
                pl.BlockSpec((1, d_in), lambda i: (0, 0)),
                pl.BlockSpec((d_in, d_out), lambda i: (0, 0)),
                pl.BlockSpec((1, d_out), lambda i: (0, 0)),
            ],
            out_specs=pl.BlockSpec((tb, d_out), lambda i: (i, 0)),
        ),
        compiler_params=pltpu.CompilerParams(
            dimension_semantics=("parallel",),
            vmem_limit_bytes=32 * 1024 * 1024,
        ),
    )(x, w1_t, b1, w2_t, b2)

    return out


def _xavier_uniform(key, shape, gain):
    # PyTorch nn.init.xavier_uniform_ on a Linear weight of shape (out, in).
    fan_out, fan_in = shape
    bound = gain * math.sqrt(6.0 / (fan_in + fan_out))
    return jax.random.uniform(key, shape, jnp.float32, -bound, bound)


def _linear_bias(key, fan_in, out_dim):
    # PyTorch nn.Linear default bias init: U(-1/sqrt(fan_in), 1/sqrt(fan_in)).
    bound = 1.0 / math.sqrt(fan_in)
    return jax.random.uniform(key, (1, out_dim), jnp.float32, -bound, bound)


if __name__ == "__main__":
    # Small shapes consistent with the module: x is (batch, input_dim).
    # batch=20 exercises multi-step grids AND the partial-last-block path.
    batch, input_dim, output_dim = 20, 32, 16

    key = jax.random.PRNGKey(0)
    k_x, k_w1, k_b1, k_w2, k_b2 = jax.random.split(key, 5)

    x = jax.random.normal(k_x, (batch, input_dim), jnp.float32)

    relu_gain = math.sqrt(2.0)   # nn.init.calculate_gain('relu')
    linear_gain = 1.0            # nn.init.calculate_gain('linear')

    # PyTorch weights are (out, in); the kernel wants (in, out) -> pass transposed.
    w1 = _xavier_uniform(k_w1, (input_dim, input_dim), relu_gain)
    w2 = _xavier_uniform(k_w2, (output_dim, input_dim), linear_gain)
    b1 = _linear_bias(k_b1, input_dim, input_dim)
    b2 = _linear_bias(k_b2, input_dim, output_dim)

    # Reference in plain JAX.
    h_ref = jnp.maximum(x @ w1.T + b1, 0.0)
    probs_ref = jax.nn.softmax(h_ref @ w2.T + b2, axis=1)

    # Default path: tb=16 -> grid of 2 steps, partial last block of 4 rows.
    probs = jax.block_until_ready(
        proposal_categorical_forward(x, w1.T, b1, w2.T, b2))
    assert probs.shape == (batch, output_dim)
    assert jnp.allclose(probs, probs_ref, atol=1e-5, rtol=1e-5)
    assert jnp.allclose(jnp.sum(probs, axis=1), 1.0, atol=1e-5)

    # Small explicit tile: 3 grid steps (tb=8) with a partial 4-row tail.
    probs2 = jax.block_until_ready(
        proposal_categorical_forward(x, w1.T, b1, w2.T, b2, block_b=8))
    assert jnp.allclose(probs2, probs_ref, atol=1e-5, rtol=1e-5)

    print("KERNEL_OK")
</pallas_src>

<mosaic_0001>
module attributes {stable_mosaic.version = 11 : i64} {
  func.func @_proposal_categorical_kernel(%arg0: i32, %arg1: memref<16x32xf32, #tpu.memory_space<vmem>>, %arg2: memref<32x32xf32, #tpu.memory_space<vmem>>, %arg3: memref<1x32xf32, #tpu.memory_space<vmem>>, %arg4: memref<32x16xf32, #tpu.memory_space<vmem>>, %arg5: memref<1x16xf32, #tpu.memory_space<vmem>>, %arg6: memref<16x16xf32, #tpu.memory_space<vmem>>) attributes {dimension_semantics = [#tpu.dimension_semantics<parallel>], iteration_bounds = array<i64: 2>, scalar_prefetch = 0 : i64, scratch_operands = 0 : i64, tpu.core_type = #tpu.core_type<tc>, window_params = [{transform_indices = @transform_0, window_bounds = array<i64: 16, 32>}, {pipeline_mode = #tpu.pipeline_mode<synchronous>, transform_indices = @transform_1, window_bounds = array<i64: 32, 32>}, {pipeline_mode = #tpu.pipeline_mode<synchronous>, transform_indices = @transform_2, window_bounds = array<i64: 1, 32>}, {pipeline_mode = #tpu.pipeline_mode<synchronous>, transform_indices = @transform_3, window_bounds = array<i64: 32, 16>}, {pipeline_mode = #tpu.pipeline_mode<synchronous>, transform_indices = @transform_4, window_bounds = array<i64: 1, 16>}, {transform_indices = @transform_5, window_bounds = array<i64: 16, 16>}]} {
    %c0 = arith.constant 0 : index
    %c0_0 = arith.constant 0 : index
    %0 = vector.load %arg1[%c0, %c0_0] : memref<16x32xf32, #tpu.memory_space<vmem>>, vector<16x32xf32>
    %c0_1 = arith.constant 0 : index
    %c0_2 = arith.constant 0 : index
    %1 = vector.load %arg2[%c0_1, %c0_2] : memref<32x32xf32, #tpu.memory_space<vmem>>, vector<32x32xf32>
    %cst = arith.constant dense<0.000000e+00> : vector<16x32xf32>
    %2 = tpu.matmul %0, %1, %cst {dimension_numbers = #tpu.dot_dimension_numbers<[1], [0], [0], [1], [0, 0, 1, 1], [], []>} : vector<16x32xf32>, vector<32x32xf32>, vector<16x32xf32> -> vector<16x32xf32>
    %c0_3 = arith.constant 0 : index
    %c0_4 = arith.constant 0 : index
    %3 = vector.load %arg3[%c0_3, %c0_4] : memref<1x32xf32, #tpu.memory_space<vmem>>, vector<1x32xf32>
    %4 = vector.broadcast %3 : vector<1x32xf32> to vector<16x32xf32>
    %5 = arith.addf %2, %4 : vector<16x32xf32>
    %cst_5 = arith.constant 0.000000e+00 : f32
    %6 = vector.broadcast %cst_5 : f32 to vector<16x32xf32>
    %7 = arith.maximumf %5, %6 : vector<16x32xf32>
    %c0_6 = arith.constant 0 : index
    %c0_7 = arith.constant 0 : index
    %8 = vector.load %arg4[%c0_6, %c0_7] : memref<32x16xf32, #tpu.memory_space<vmem>>, vector<32x16xf32>
    %cst_8 = arith.constant dense<0.000000e+00> : vector<16x16xf32>
    %9 = tpu.matmul %7, %8, %cst_8 {dimension_numbers = #tpu.dot_dimension_numbers<[1], [0], [0], [1], [0, 0, 1, 1], [], []>} : vector<16x32xf32>, vector<32x16xf32>, vector<16x16xf32> -> vector<16x16xf32>
    %c0_9 = arith.constant 0 : index
    %c0_10 = arith.constant 0 : index
    %10 = vector.load %arg5[%c0_9, %c0_10] : memref<1x16xf32, #tpu.memory_space<vmem>>, vector<1x16xf32>
    %11 = vector.broadcast %10 : vector<1x16xf32> to vector<16x16xf32>
    %12 = arith.addf %9, %11 : vector<16x16xf32>
    %cst_11 = arith.constant dense<0xFF800000> : vector<16xf32>
    %13 = vector.multi_reduction <maximumf>, %12, %cst_11 [1] : vector<16x16xf32> to vector<16xf32>
    %14 = vector.shape_cast %13 : vector<16xf32> to vector<16x1xf32>
    %15 = vector.broadcast %14 : vector<16x1xf32> to vector<16x16xf32>
    %16 = arith.subf %12, %15 : vector<16x16xf32>
    %17 = math.exp %16 : vector<16x16xf32>
    %cst_12 = arith.constant dense<0.000000e+00> : vector<16xf32>
    %18 = vector.multi_reduction <add>, %17, %cst_12 [1] : vector<16x16xf32> to vector<16xf32>
    %19 = vector.shape_cast %18 : vector<16xf32> to vector<16x1xf32>
    %20 = tpu.reciprocal %19 {approx = true} : vector<16x1xf32> -> vector<16x1xf32>
    %21 = arith.mulf %19, %20 : vector<16x1xf32>
    %cst_13 = arith.constant 2.000000e+00 : f32
    %22 = vector.broadcast %cst_13 : f32 to vector<16x1xf32>
    %23 = arith.subf %22, %21 : vector<16x1xf32>
    %24 = arith.mulf %20, %23 : vector<16x1xf32>
    %25 = vector.broadcast %24 : vector<16x1xf32> to vector<16x16xf32>
    %26 = arith.mulf %17, %25 : vector<16x16xf32>
    %c0_14 = arith.constant 0 : index
    %c0_15 = arith.constant 0 : index
    %27 = vector.load %arg6[%c0_14, %c0_15] : memref<16x16xf32, #tpu.memory_space<vmem>>, vector<16x16xf32>
    tpu.vector_store %arg6[%c0_14, %c0_15], %26 {strides = array<i32>} : memref<16x16xf32, #tpu.memory_space<vmem>>, vector<16x16xf32>,
    return
  }
  func.func @transform_0(%arg0: i32) -> (i32, i32) {
    %c0_i32 = arith.constant 0 : i32
    %c0_i32_0 = arith.constant 0 : i32
    return %arg0, %c0_i32 : i32, i32
  }
  func.func @transform_1(%arg0: i32) -> (i32, i32) {
    %c0_i32 = arith.constant 0 : i32
    %c0_i32_0 = arith.constant 0 : i32
    %c0_i32_1 = arith.constant 0 : i32
    return %c0_i32, %c0_i32_0 : i32, i32
  }
  func.func @transform_2(%arg0: i32) -> (i32, i32) {
    %c0_i32 = arith.constant 0 : i32
    %c0_i32_0 = arith.constant 0 : i32
    %c0_i32_1 = arith.constant 0 : i32
    return %c0_i32, %c0_i32_0 : i32, i32
  }
  func.func @transform_3(%arg0: i32) -> (i32, i32) {
    %c0_i32 = arith.constant 0 : i32
    %c0_i32_0 = arith.constant 0 : i32
    %c0_i32_1 = arith.constant 0 : i32
    return %c0_i32, %c0_i32_0 : i32, i32
  }
  func.func @transform_4(%arg0: i32) -> (i32, i32) {
    %c0_i32 = arith.constant 0 : i32
    %c0_i32_0 = arith.constant 0 : i32
    %c0_i32_1 = arith.constant 0 : i32
    return %c0_i32, %c0_i32_0 : i32, i32
  }
  func.func @transform_5(%arg0: i32) -> (i32, i32) {
    %c0_i32 = arith.constant 0 : i32
    %c0_i32_0 = arith.constant 0 : i32
    return %arg0, %c0_i32 : i32, i32
  }
}

</mosaic_0001>

<llo_original>
// kernel: tpu_custom_call.1
$region0: #{tpu_custom_call.1}
  #allocation0 [shape = 'u32[]', space=smem, size = 0x4, offset = 0x4, fixed_abs, tag = 'smem constant byte address 0x4 - core index']
  #allocation1 [shape = 'u32[144,128]{1,0:T(1,128)}', space=vmem, size = 0x12000, scoped, tag = 'internal scratch']
  %s0 = inlined_call_operand.hbm [shape: f32[20,32], index: 0, kind: input, shape index: {}]
  %s1 = inlined_call_operand.vmem [shape: f32[32,32], index: 1, kind: input, shape index: {}]
  %s2 = inlined_call_operand.vmem [shape: f32[1,32], index: 2, kind: input, shape index: {}]
  %s3 = inlined_call_operand.vmem [shape: f32[32,16], index: 3, kind: input, shape index: {}]
  %s4 = inlined_call_operand.vmem [shape: f32[1,16], index: 4, kind: input, shape index: {}]
  %s5 = inlined_call_operand.vmem [shape: f32[20,16], index: 5, kind: output, shape index: {}]
  %s6 = sld [smem:[#allocation0]]
  $region105: #{tpu_custom_call.1} parent=0
    _
  %s8 = ssub.s32 1, %s6
  %s9 = scalar_select 0, %s8, %s6
  $region1: #{tpu_custom_call.1} parent=0
    #allocation2 [shape = 'u8[16384]{0}', space=vmem, size = 0x4000, scoped, tag = 'input window, operand 0']
    #allocation3 [shape = 's32[2]{0}', space=sflag, size = 0x8, scoped, tag = 'scoped memory for tpu_custom_call.1']
    #allocation4 [shape = 'u8[16384]{0}', space=vmem, size = 0x4000, scoped, tag = 'output window, operand 0']
    %10 = vsyncpa [#allocation3], 0
    %s11 = scalar_lea.sflag [#allocation3], 1
    %12 = vsyncpa %s11, 0
    loop: start=0, step=1, limit=4
    $region2: #{tpu_custom_call.1} parent=1 // loop_pre_header
      _
    $region3: #{tpu_custom_call.1} parent=1 // loop_header
      %s14 = sphi 0, %s18
      %p15 = scmp.ge.s32.totalorder %s14, 4
      %s24 = sphi 0, %s26
      %s27 = sphi 0, %s24
      %s28 = sphi 0, %s27
      %s44 = sphi 0, %s28
      %s48 = sphi 0, %s48
      %s50 = sphi 0, %s48
      %s51 = sphi 0, %s50
      %s65 = sphi 0, %s51
      %s69 = sphi 0, %s69
      %s71 = sphi 0, %s69
      %s72 = sphi 0, %s71
      %s86 = sphi 0, %s72
      %s90 = sphi 0, %s90
      %s92 = sphi 0, %s90
      %s93 = sphi 0, %s92
      %s107 = sphi 0, %s93
      %s111 = sphi 0, %s111
      %s113 = sphi 0, %s111
      %s114 = sphi 0, %s113
      %s128 = sphi 0, %s114
      %s134 = sphi 0, %s136
      %s137 = sphi 0, %s134
      %s138 = sphi 0, %s137
      %s154 = sphi 0, %s138
    $region4: #{tpu_custom_call.1} parent=1 // loop_header_branch
      %17 = sbr.rel (%p15) target = $region8
    $region5: #{tpu_custom_call.1} parent=1 // loop_body
      %s19 = ssub.s32 %s14, 1
      %s20 = ssub.s32 %s14, 2
      %s21 = sadd.s32 %s14, 1
      %s22 = ssub.s32 %s14, %s21
      %p23 = scmp.eq.s32.totalorder %s22, 0
      %s25 = sadd.s32 %s24, 1
      %s26 = scalar_select %p23, %s24, %s25
      %p29 = pneg %p23
      %p30 = scmp.eq.s32.totalorder %s14, 1
      %p31 = por %p29, %p30
      %p32 = scmp.ne.s32.totalorder %s24, %s27
      %p33 = scmp.eq.s32.totalorder %s14, 0
      %p34 = por %p32, %p33
      %p35 = scmp.ne.s32.totalorder %s24, %s27
      %p36 = scmp.eq.s32.totalorder %s19, 1
      %p37 = por %p35, %p36
      %p38 = scmp.ne.s32.totalorder %s27, %s28
      %p39 = scmp.eq.s32.totalorder %s19, 0
      %p40 = por %p38, %p39
      %p41 = scmp.ne.s32.totalorder %s27, %s28
      %p42 = scmp.eq.s32.totalorder %s20, 1
      %p43 = por %p41, %p42
      %p45 = scmp.ne.s32.totalorder %s28, %s44
      %p46 = scmp.eq.s32.totalorder %s20, 0
      %p47 = por %p45, %p46
      %s49 = sadd.s32 %s48, 1
      %p52 = scmp.eq.s32.totalorder %s14, 1
      %p53 = scmp.ne.s32.totalorder %s48, %s50
      %p54 = scmp.eq.s32.totalorder %s14, 0
      %p55 = por %p53, %p54
      %p56 = scmp.ne.s32.totalorder %s48, %s50
      %p57 = scmp.eq.s32.totalorder %s19, 1
      %p58 = por %p56, %p57
      %p59 = scmp.ne.s32.totalorder %s50, %s51
      %p60 = scmp.eq.s32.totalorder %s19, 0
      %p61 = por %p59, %p60
      %p62 = scmp.ne.s32.totalorder %s50, %s51
      %p63 = scmp.eq.s32.totalorder %s20, 1
      %p64 = por %p62, %p63
      %p66 = scmp.ne.s32.totalorder %s51, %s65
      %p67 = scmp.eq.s32.totalorder %s20, 0
      %p68 = por %p66, %p67
      %s70 = sadd.s32 %s69, 1
      %p73 = scmp.eq.s32.totalorder %s14, 1
      %p74 = scmp.ne.s32.totalorder %s69, %s71
      %p75 = scmp.eq.s32.totalorder %s14, 0
      %p76 = por %p74, %p75
      %p77 = scmp.ne.s32.totalorder %s69, %s71
      %p78 = scmp.eq.s32.totalorder %s19, 1
      %p79 = por %p77, %p78
      %p80 = scmp.ne.s32.totalorder %s71, %s72
      %p81 = scmp.eq.s32.totalorder %s19, 0
      %p82 = por %p80, %p81
      %p83 = scmp.ne.s32.totalorder %s71, %s72
      %p84 = scmp.eq.s32.totalorder %s20, 1
      %p85 = por %p83, %p84
      %p87 = scmp.ne.s32.totalorder %s72, %s86
      %p88 = scmp.eq.s32.totalorder %s20, 0
      %p89 = por %p87, %p88
      %s91 = sadd.s32 %s90, 1
      %p94 = scmp.eq.s32.totalorder %s14, 1
      %p95 = scmp.ne.s32.totalorder %s90, %s92
      %p96 = scmp.eq.s32.totalorder %s14, 0
      %p97 = por %p95, %p96
      %p98 = scmp.ne.s32.totalorder %s90, %s92
      %p99 = scmp.eq.s32.totalorder %s19, 1
      %p100 = por %p98, %p99
      %p101 = scmp.ne.s32.totalorder %s92, %s93
      %p102 = scmp.eq.s32.totalorder %s19, 0
      %p103 = por %p101, %p102
      %p104 = scmp.ne.s32.totalorder %s92, %s93
      %p105 = scmp.eq.s32.totalorder %s20, 1
      %p106 = por %p104, %p105
      %p108 = scmp.ne.s32.totalorder %s93, %s107
      %p109 = scmp.eq.s32.totalorder %s20, 0
      %p110 = por %p108, %p109
      %s112 = sadd.s32 %s111, 1
      %p115 = scmp.eq.s32.totalorder %s14, 1
      %p116 = scmp.ne.s32.totalorder %s111, %s113
      %p117 = scmp.eq.s32.totalorder %s14, 0
      %p118 = por %p116, %p117
      %p119 = scmp.ne.s32.totalorder %s111, %s113
      %p120 = scmp.eq.s32.totalorder %s19, 1
      %p121 = por %p119, %p120
      %p122 = scmp.ne.s32.totalorder %s113, %s114
      %p123 = scmp.eq.s32.totalorder %s19, 0
      %p124 = por %p122, %p123
      %p125 = scmp.ne.s32.totalorder %s113, %s114
      %p126 = scmp.eq.s32.totalorder %s20, 1
      %p127 = por %p125, %p126
      %p129 = scmp.ne.s32.totalorder %s114, %s128
      %p130 = scmp.eq.s32.totalorder %s20, 0
      %p131 = por %p129, %p130
      %s132 = ssub.s32 %s14, %s21
      %p133 = scmp.eq.s32.totalorder %s132, 0
      %s135 = sadd.s32 %s134, 1
      %s136 = scalar_select %p133, %s134, %s135
      %p139 = pneg %p133
      %p140 = scmp.eq.s32.totalorder %s14, 1
      %p141 = por %p139, %p140
      %p142 = scmp.ne.s32.totalorder %s134, %s137
      %p143 = scmp.eq.s32.totalorder %s14, 0
      %p144 = por %p142, %p143
      %p145 = scmp.ne.s32.totalorder %s134, %s137
      %p146 = scmp.eq.s32.totalorder %s19, 1
      %p147 = por %p145, %p146
      %p148 = scmp.ne.s32.totalorder %s137, %s138
      %p149 = scmp.eq.s32.totalorder %s19, 0
      %p150 = por %p148, %p149
      %p151 = scmp.ne.s32.totalorder %s137, %s138
      %p152 = scmp.eq.s32.totalorder %s20, 1
      %p153 = por %p151, %p152
      %p155 = scmp.ne.s32.totalorder %s138, %s154
      %p156 = scmp.eq.s32.totalorder %s20, 0
      %p157 = por %p155, %p156
      %p158 = scmp.le.s32.totalorder 1, %s14
      %p159 = scmp.lt.s32.totalorder %s14, 3
      %p160 = pnand %p158, %p159
      %p161 = pneg %p160
      // Predicated region
      $region9: #{tpu_custom_call.1} parent=5 // pred_check
        _
      $region10: #{tpu_custom_call.1} parent=5 // pred_check_branch
        %163 = sbr.rel (%p160) target = $region12
      $region11: #{tpu_custom_call.1} parent=5 // pred_region
        %s164 = ssub.s32 %s14, 1
        // Predicated region
        $region13: #{tpu_custom_call.1} parent=11 // pred_check
          %p165 = pneg %p61
        $region14: #{tpu_custom_call.1} parent=11 // pred_check_branch
          %167 = sbr.rel (%p165) target = $region16
        $region15: #{tpu_custom_call.1} parent=11 // pred_region
          _
        $region16: #{tpu_custom_call.1} parent=11 // pred_fallthru
          _
        // Predicated region
        $region17: #{tpu_custom_call.1} parent=11 // pred_check
          %p168 = pneg %p82
        $region18: #{tpu_custom_call.1} parent=11 // pred_check_branch
          %170 = sbr.rel (%p168) target = $region20
        $region19: #{tpu_custom_call.1} parent=11 // pred_region
          _
        $region20: #{tpu_custom_call.1} parent=11 // pred_fallthru
          _
        // Predicated region
        $region21: #{tpu_custom_call.1} parent=11 // pred_check
          %p171 = pneg %p103
        $region22: #{tpu_custom_call.1} parent=11 // pred_check_branch
          %173 = sbr.rel (%p171) target = $region24
        $region23: #{tpu_custom_call.1} parent=11 // pred_region
          _
        $region24: #{tpu_custom_call.1} parent=11 // pred_fallthru
          _
        // Predicated region
        $region25: #{tpu_custom_call.1} parent=11 // pred_check
          %p174 = pneg %p124
        $region26: #{tpu_custom_call.1} parent=11 // pred_check_branch
          %176 = sbr.rel (%p174) target = $region28
        $region27: #{tpu_custom_call.1} parent=11 // pred_region
          _
        $region28: #{tpu_custom_call.1} parent=11 // pred_fallthru
          _
      $region12: #{tpu_custom_call.1} parent=5 // pred_fallthru
        _
      %p177 = scmp.lt.s32.totalorder %s14, 2
      // Predicated region
      $region29: #{tpu_custom_call.1} parent=5 // pred_check
        %p178 = pneg %p177
      $region30: #{tpu_custom_call.1} parent=5 // pred_check_branch
        %180 = sbr.rel (%p178) target = $region32
      $region31: #{tpu_custom_call.1} parent=5 // pred_region
        // Predicated region
        $region33: #{tpu_custom_call.1} parent=31 // pred_check
          %p181 = pneg %p34
        $region34: #{tpu_custom_call.1} parent=31 // pred_check_branch
          %183 = sbr.rel (%p181) target = $region36
        $region35: #{tpu_custom_call.1} parent=31 // pred_region
          %s184 = sand.u32 %s24, 1
          %s185 = scalar_lea.sflag [#allocation3], %s184
          %s186 = sand.u32 %s24, 1
          %s187 = smul.addr %s186, 16
          %s188 = scalar_lea.vmem [#allocation2], %s187
          %s189 = smul.u32 2, %s14
          %s190 = ssub.s32 3, %s189
          %p191 = scmp.lt.s32.totalorder %s190, 2
          %s192 = scalar_select %p191, %s190, 2
          %s193 = smul.u32 128, %s192
          %s195 = ssub.s32 256, %s193
          %196 = vsyncadd %s185, %s195
          %p197 = scmp.ne.s32.totalorder 0, %s193
          %s198 = smul.addr %s189, 128
          %s199 = scalar_lea.hbm %s0, %s198
          %s200 = smul.u32 8, %s192
          %s201 = sshll.u32 %s188, 4
          %s202 = int_to_ptr.vmem [resolvable:$true] %s201
          %s203 = sshll.u32 %s200, 4
          %207 = dma.hbm_to_vmem [thread:$0]  (%p197), %s199, %s203, %s202, %s185, 128, 128, 8
        $region36: #{tpu_custom_call.1} parent=31 // pred_fallthru
          _
      $region32: #{tpu_custom_call.1} parent=5 // pred_fallthru
        _
      %p208 = scmp.le.s32.totalorder 1, %s14
      %p209 = scmp.lt.s32.totalorder %s14, 3
      %p210 = pnand %p208, %p209
      %p211 = pneg %p210
      // Predicated region
      $region37: #{tpu_custom_call.1} parent=5 // pred_check
        _
      $region38: #{tpu_custom_call.1} parent=5 // pred_check_branch
        %213 = sbr.rel (%p210) target = $region40
      $region39: #{tpu_custom_call.1} parent=5 // pred_region
        %s214 = ssub.s32 %s14, 1
        %s215 = sand.u32 %s27, 1
        %s216 = scalar_lea.sflag [#allocation3], %s215
        %s217 = sand.u32 %s27, 1
        %s218 = smul.addr %s217, 16
        %s219 = scalar_lea.vmem [#allocation2], %s218
        // Predicated region
        $region41: #{tpu_custom_call.1} parent=39 // pred_check
          %p220 = pneg %p40
        $region42: #{tpu_custom_call.1} parent=39 // pred_check_branch
          %222 = sbr.rel (%p220) target = $region44
        $region43: #{tpu_custom_call.1} parent=39 // pred_region
          %223 = dma.done %s216, 256
        $region44: #{tpu_custom_call.1} parent=39 // pred_fallthru
          _
        %s224 = sand.u32 %s27, 1
        %s225 = scalar_lea.sflag [#allocation3], %s224
        %s226 = sand.u32 %s27, 1
        %s227 = smul.addr %s226, 16
        %s228 = scalar_lea.vmem [#allocation2], %s227
        %p229 = pneg %p40
        %p230 = pneg %p37
        %p231 = pneg %p61
        %p232 = pneg %p58
        %p233 = pneg %p82
        %p234 = pneg %p79
        %p235 = pneg %p103
        %p236 = pneg %p100
        %p237 = pneg %p124
        %p238 = pneg %p121
        %p239 = pneg %p150
        %p240 = pneg %p147
        %s241 = sand.u32 %s137, 1
        %s242 = sand.u32 %s137, 1
        %s243 = smul.addr %s242, 16
        %s244 = scalar_lea.vmem [#allocation4], %s243
        %s245 = smul.u32 2, %s19
        %s246 = ssub.s32 3, %s245
        %p247 = scmp.lt.s32.totalorder %s246, 2
        %s248 = scalar_select %p247, %s246, 2
        %s249 = smul.u32 128, %s248
        %s250 = smul.u32 2, %s19
        %s251 = ssub.s32 3, %s250
        %p252 = scmp.lt.s32.totalorder %s251, 2
        %s253 = scalar_select %p252, %s251, 2
        %s254 = smul.u32 128, %s253
        %v255 = vld [vmem:[%s219] sm:$0xff]
        %v256 = vld [vmem:[%s219 + $0x8] sm:$0xff]
        %v257 = vld [vmem:[%s1] sm:$0xff]
        %v258 = vld [vmem:[%s1 + $0x8] sm:$0xff]
        %v259 = vld [vmem:[%s1 + $0x10] sm:$0xff]
        %v260 = vld [vmem:[%s1 + $0x18] sm:$0xff]
        %v261 = vld [vmem:[%s2] sm:$0x1]
        %v263 = vlaneseq
        %v264 = vshrl.u32 %v263, 7
        %v265 = vsub.s32 0, %v264
        %v266 = vrot.slane %v261, %v265
        %vm268 = vcmask 261120
        %v270 = vsel %vm268, %v255, 0
        %v273 = vsel %vm268, %v256, 0
        %275 = vmatprep.subr.mxu0 0.0
        %276 = vmatpush1.msra.mxu0 0.0
        %277 = vmatprep.subr.mxu0 0.0
        %278 = vmatpush1.msra.mxu0 0.0
        %279 = vmatprep.subr.mxu0 0.0
        %280 = vmatpush1.msra.mxu0 0.0
        %281 = vmatprep.subr.mxu0 0.0
        %282 = vmatpush1.msra.mxu0 0.0
        %283 = vmatprep.subr.mxu0 0.0
        %284 = vmatpush1.msra.mxu0 0.0
        %285 = vmatprep.subr.mxu0 0.0
        %286 = vmatpush1.msra.mxu0 0.0
        %287 = vmatprep.subr.mxu0 0.0
        %288 = vmatpush1.msra.mxu0 0.0
        %289 = vmatprep.subr.mxu0 0.0
        %290 = vmatpush1.msra.mxu0 0.0
        %291 = vmatprep.subr.mxu0 0.0
        %292 = vmatpush1.msra.mxu0 0.0
        %293 = vmatprep.subr.mxu0 0.0
        %294 = vmatpush1.msra.mxu0 0.0
        %295 = vmatprep.subr.mxu0 0.0
        %296 = vmatpush1.msra.mxu0 0.0
        %297 = vmatprep.subr.mxu0 0.0
        %298 = vmatpush1.msra.mxu0 0.0
        %299 = vmatprep.subr.mxu0 0.0
        %300 = vmatpush1.msra.mxu0 %v260
        %301 = vmatprep.subr.mxu0 0.0
        %302 = vmatpush1.msra.mxu0 %v259
        %303 = vmatprep.subr.mxu0 0.0
        %304 = vmatpush1.msra.mxu0 %v258
        %305 = vmatprep.subr.mxu0 0.0
        %306 = vmatpush1.msra.mxu0 %v257
        %307 = vmatprep.subr.mxu0 0.0
        %308 = vmatpush2.msra.mxu0 0.0
        %309 = vmatprep.subr.mxu0 0.0
        %310 = vmatpush2.msra.mxu0 0.0
        %311 = vmatprep.subr.mxu0 0.0
        %312 = vmatpush2.msra.mxu0 0.0
        %313 = vmatprep.subr.mxu0 0.0
        %314 = vmatpush2.msra.mxu0 0.0
        %315 = vmatprep.subr.mxu0 0.0
        %316 = vmatpush2.msra.mxu0 0.0
        %317 = vmatprep.subr.mxu0 0.0
        %318 = vmatpush2.msra.mxu0 0.0
        %319 = vmatprep.subr.mxu0 0.0
        %320 = vmatpush2.msra.mxu0 0.0
        %321 = vmatprep.subr.mxu0 0.0
        %322 = vmatpush2.msra.mxu0 0.0
        %323 = vmatprep.subr.mxu0 0.0
        %324 = vmatpush2.msra.mxu0 0.0
        %325 = vmatprep.subr.mxu0 0.0
        %326 = vmatpush2.msra.mxu0 0.0
        %327 = vmatprep.subr.mxu0 0.0
        %328 = vmatpush2.msra.mxu0 0.0
        %329 = vmatprep.subr.mxu0 0.0
        %330 = vmatpush2.msra.mxu0 0.0
        %331 = vmatprep.subr.mxu0 0.0
        %332 = vmatpush2.msra.mxu0 0.0
        %333 = vmatprep.subr.mxu0 0.0
        %334 = vmatpush2.msra.mxu0 0.0
        %335 = vmatprep.subr.mxu0 0.0
        %336 = vmatpush2.msra.mxu0 0.0
        %337 = vmatprep.subr.mxu0 0.0
        %338 = vmatpush2.msra.mxu0 0.0
        %339 = vmatprep.mubr.f32.mxu0 0.0
        %340 = vmatmul.mubr.f32.gmra.mxu0 %v270
        %v341 = vpop.f32.mrf.mxu0
        %v342 = vadd.f32 %v266, %v341
        %v343 = vpop.f32.mrf.mxu0
        %344 = vmatprep.mubr.f32.mxu0 0.0
        %345 = vmatmul.mubr.f32.gmra.mxu0 %v273
        %v346 = vpop.f32.mrf.mxu0
        %v347 = vadd.f32 %v266, %v346
        %v348 = vpop.f32.mrf.mxu0
        %349 = vdwg.mxu0
        %v350 = vmax.f32 %v342, 0.0
        %v351 = vmax.f32 %v347, 0.0
        %v352 = vld [vmem:[%s3] sm:$0xff]
        %v353 = vld [vmem:[%s3 + $0x8] sm:$0xff]
        %v354 = vld [vmem:[%s3 + $0x10] sm:$0xff]
        %v355 = vld [vmem:[%s3 + $0x18] sm:$0xff]
        %v356 = vld [vmem:[%s4] sm:$0x1]
        %v358 = vlaneseq
        %v359 = vshrl.u32 %v358, 7
        %v360 = vsub.s32 0, %v359
        %v361 = vrot.slane %v356, %v360
        %v364 = vsel %vm268, %v350, 0
        %v367 = vsel %vm268, %v351, 0
        %369 = vmatprep.subr.mxu0 0.0
        %370 = vmatpush1.msra.mxu0 0.0
        %371 = vmatprep.subr.mxu0 0.0
        %372 = vmatpush1.msra.mxu0 0.0
        %373 = vmatprep.subr.mxu0 0.0
        %374 = vmatpush1.msra.mxu0 0.0
        %375 = vmatprep.subr.mxu0 0.0
        %376 = vmatpush1.msra.mxu0 0.0
        %377 = vmatprep.subr.mxu0 0.0
        %378 = vmatpush1.msra.mxu0 0.0
        %379 = vmatprep.subr.mxu0 0.0
        %380 = vmatpush1.msra.mxu0 0.0
        %381 = vmatprep.subr.mxu0 0.0
        %382 = vmatpush1.msra.mxu0 0.0
        %383 = vmatprep.subr.mxu0 0.0
        %384 = vmatpush1.msra.mxu0 0.0
        %385 = vmatprep.subr.mxu0 0.0
        %386 = vmatpush1.msra.mxu0 0.0
        %387 = vmatprep.subr.mxu0 0.0
        %388 = vmatpush1.msra.mxu0 0.0
        %389 = vmatprep.subr.mxu0 0.0
        %390 = vmatpush1.msra.mxu0 0.0
        %391 = vmatprep.subr.mxu0 0.0
        %392 = vmatpush1.msra.mxu0 0.0
        %393 = vmatprep.subr.mxu0 0.0
        %394 = vmatpush1.msra.mxu0 %v355
        %395 = vmatprep.subr.mxu0 0.0
        %396 = vmatpush1.msra.mxu0 %v354
        %397 = vmatprep.subr.mxu0 0.0
        %398 = vmatpush1.msra.mxu0 %v353
        %399 = vmatprep.subr.mxu0 0.0
        %400 = vmatpush1.msra.mxu0 %v352
        %401 = vmatprep.subr.mxu0 0.0
        %402 = vmatpush2.msra.mxu0 0.0
        %403 = vmatprep.subr.mxu0 0.0
        %404 = vmatpush2.msra.mxu0 0.0
        %405 = vmatprep.subr.mxu0 0.0
        %406 = vmatpush2.msra.mxu0 0.0
        %407 = vmatprep.subr.mxu0 0.0
        %408 = vmatpush2.msra.mxu0 0.0
        %409 = vmatprep.subr.mxu0 0.0
        %410 = vmatpush2.msra.mxu0 0.0
        %411 = vmatprep.subr.mxu0 0.0
        %412 = vmatpush2.msra.mxu0 0.0
        %413 = vmatprep.subr.mxu0 0.0
        %414 = vmatpush2.msra.mxu0 0.0
        %415 = vmatprep.subr.mxu0 0.0
        %416 = vmatpush2.msra.mxu0 0.0
        %417 = vmatprep.subr.mxu0 0.0
        %418 = vmatpush2.msra.mxu0 0.0
        %419 = vmatprep.subr.mxu0 0.0
        %420 = vmatpush2.msra.mxu0 0.0
        %421 = vmatprep.subr.mxu0 0.0
        %422 = vmatpush2.msra.mxu0 0.0
        %423 = vmatprep.subr.mxu0 0.0
        %424 = vmatpush2.msra.mxu0 0.0
        %425 = vmatprep.subr.mxu0 0.0
        %426 = vmatpush2.msra.mxu0 0.0
        %427 = vmatprep.subr.mxu0 0.0
        %428 = vmatpush2.msra.mxu0 0.0
        %429 = vmatprep.subr.mxu0 0.0
        %430 = vmatpush2.msra.mxu0 0.0
        %431 = vmatprep.subr.mxu0 0.0
        %432 = vmatpush2.msra.mxu0 0.0
        %433 = vmatprep.mubr.f32.mxu0 0.0
        %434 = vmatmul.mubr.f32.gmra.mxu0 %v364
        %v435 = vpop.f32.mrf.mxu0
        %v436 = vadd.f32 %v361, %v435
        %v437 = vpop.f32.mrf.mxu0
        %438 = vmatprep.mubr.f32.mxu0 0.0
        %439 = vmatmul.mubr.f32.gmra.mxu0 %v367
        %v440 = vpop.f32.mrf.mxu0
        %v441 = vadd.f32 %v361, %v440
        %v442 = vpop.f32.mrf.mxu0
        %443 = vdwg.mxu0
        %vm444 = vcmask 130048
        %v445 = vsel %vm444, %v436, -inf
        %446 = vmax.xlane.f32.xlu0 %v445
        %v447 = vpop.xlane.xlu0 %446
        %v448 = vsel %vm444, %v441, -inf
        %449 = vmax.xlane.f32.xlu0 %v448
        %v450 = vpop.xlane.xlu0 %449
        %v451 = vsub.f32 %v436, %v447
        %v452 = vsub.f32 %v441, %v450
        %v453 = vmul.f32 %v451, 1.442695
        %v454 = vpow.pop %v453
        %v455 = vmul.f32 %v452, 1.442695
        %v456 = vpow.pop %v455
        %v457 = vsel %vm444, %v454, 0.0
        %458 = vadd.xlane.f32.xlu0 %v457
        %v459 = vpop.xlane.xlu0 %458
        %v460 = vsel %vm444, %v456, 0.0
        %461 = vadd.xlane.f32.xlu0 %v460
        %v462 = vpop.xlane.xlu0 %461
        %v463 = vrcp.pop %v459
        %v464 = vrcp.pop %v462
        %v465 = vmul.f32 %v459, %v463
        %v466 = vmul.f32 %v462, %v464
        %v467 = vsub.f32 2.0, %v465
        %v468 = vsub.f32 2.0, %v466
        %v469 = vmul.f32 %v463, %v467
        %v470 = vmul.f32 %v464, %v468
        %v471 = vmul.f32 %v454, %v469
        %v472 = vmul.f32 %v456, %v470
        %473 = vst.msk [vmem:[%s244] sm:$0xff] %vm444, %v471
        %474 = vst.msk [vmem:[%s244 + $0x8] sm:$0xff] %vm444, %v472
        %s475 = sand.u32 %s137, 1
        %s476 = sand.u32 %s137, 1
        %s477 = smul.addr %s476, 16
        %s478 = scalar_lea.vmem [#allocation4], %s477
        // Predicated region
        $region45: #{tpu_custom_call.1} parent=39 // pred_check
          %p479 = pneg %p147
        $region46: #{tpu_custom_call.1} parent=39 // pred_check_branch
          %481 = sbr.rel (%p479) target = $region48
        $region47: #{tpu_custom_call.1} parent=39 // pred_region
          %s482 = smul.u32 2, %s19
          %s483 = ssub.s32 3, %s482
          %p484 = scmp.lt.s32.totalorder %s483, 2
          %s485 = scalar_select %p484, %s483, 2
          %s486 = smul.u32 128, %s485
          %p487 = scmp.ne.s32.totalorder 0, %s486
          %s488 = smul.addr %s482, 8
          %s489 = scalar_lea.vmem %s5, %s488
          // Predicated region
          $region49: #{tpu_custom_call.1} parent=47 // pred_check
            %p490 = pneg %p487
          $region50: #{tpu_custom_call.1} parent=47 // pred_check_branch
            %492 = sbr.rel (%p490) target = $region52
          $region51: #{tpu_custom_call.1} parent=47 // pred_region
            // Predicated region
            $region53: #{tpu_custom_call.1} parent=51 // pred_check
              _
            $region54: #{tpu_custom_call.1} parent=51 // pred_check_branch
              %494 = sbr.rel (0) target = $region56
            $region55: #{tpu_custom_call.1} parent=51 // pred_region
              // Predicated region
              $region75: #{tpu_custom_call.1} parent=55 // pred_check
                _
              $region76: #{tpu_custom_call.1} parent=55 // pred_check_branch
                %546 = sbr.rel (0) target = $region78
              $region77: #{tpu_custom_call.1} parent=55 // pred_region
                %s547 = sshrl.u32 %s485, 1
                // While loop
                $region79: #{tpu_custom_call.1} parent=77 // loop_pre_header
                  _
                $region80: #{tpu_custom_call.1} parent=77 // loop_header
                  %s549 = sphi 0, %s551
                  %p550 = scmp.ge.s32.totalorder %s549, %s547
                  %s554 = sphi 0, %s563
                  %s555 = sphi %s478, %s566
                  %s556 = sphi %s489, %s567
                $region81: #{tpu_custom_call.1} parent=77 // loop_header_branch
                  %553 = sbr.rel (%p550) target = $region85
                $region82: #{tpu_custom_call.1} parent=77 // loop_body
                  %v557 = vld [vmem:[%s555] sm:$0xff]
                  %558 = vst [vmem:[%s556] sm:$0xff] %v557
                  %v559 = vld [vmem:[%s555 + $0x8] sm:$0xff]
                  %560 = vst [vmem:[%s556 + $0x8] sm:$0xff] %v559
                  %s561 = sadd.s32 1, %s554
                  %p562 = scmp.ge.s32.totalorder %s561, %s547
                  %s563 = scalar_select %p562, 0, %s561
                  %s564 = smul.u32 %s563, 16
                  %s565 = smul.u32 %s563, 16
                  %s566 = scalar_lea.vmem %s478, %s564 [#allocation4]
                  %s567 = scalar_lea.vmem %s489, %s565
                $region83: #{tpu_custom_call.1} parent=77 // loop_footer
                  %s551 = sadd.s32 %s549, 1
                $region84: #{tpu_custom_call.1} parent=77 // loop_footer_branch
                  %548 = sbr.rel target = $region80
                $region85: #{tpu_custom_call.1} parent=77 // loop_exit
                  _
                %s568 = sshrl.u32 %s485, 1
                %s569 = sand.u32 %s485, 1
                %s570 = smul.u32 %s568, 2
                %s571 = smul.u32 8, %s570
                %s572 = scalar_lea.vmem %s478, %s571 [#allocation4]
                %s573 = smul.u32 8, %s570
                %s574 = scalar_lea.vmem %s489, %s573
                // While loop
                $region86: #{tpu_custom_call.1} parent=77 // loop_pre_header
                  _
                $region87: #{tpu_custom_call.1} parent=77 // loop_header
                  %s576 = sphi 0, %s578
                  %p577 = scmp.ge.s32.totalorder %s576, %s569
                  %s581 = sphi 0, %s588
                  %s582 = sphi %s572, %s591
                  %s583 = sphi %s574, %s592
                $region88: #{tpu_custom_call.1} parent=77 // loop_header_branch
                  %580 = sbr.rel (%p577) target = $region92
                $region89: #{tpu_custom_call.1} parent=77 // loop_body
                  %v584 = vld [vmem:[%s582] sm:$0xff]
                  %585 = vst [vmem:[%s583] sm:$0xff] %v584
                  %s586 = sadd.s32 1, %s581
                  %p587 = scmp.ge.s32.totalorder %s586, %s569
                  %s588 = scalar_select %p587, 0, %s586
                  %s589 = smul.u32 %s588, 8
                  %s590 = smul.u32 %s588, 8
                  %s591 = scalar_lea.vmem %s572, %s589 [#allocation4]
                  %s592 = scalar_lea.vmem %s574, %s590
                $region90: #{tpu_custom_call.1} parent=77 // loop_footer
                  %s578 = sadd.s32 %s576, 1
                $region91: #{tpu_custom_call.1} parent=77 // loop_footer_branch
                  %575 = sbr.rel target = $region87
                $region92: #{tpu_custom_call.1} parent=77 // loop_exit
                  _
              $region78: #{tpu_custom_call.1} parent=55 // pred_fallthru
                _
              // Predicated region
              $region93: #{tpu_custom_call.1} parent=55 // pred_check
                _
              $region94: #{tpu_custom_call.1} parent=55 // pred_check_branch
                %594 = sbr.rel target = $region96
              $region95: #{tpu_custom_call.1} parent=55 // pred_region
                _
              $region96: #{tpu_custom_call.1} parent=55 // pred_fallthru
                _
            $region56: #{tpu_custom_call.1} parent=51 // pred_fallthru
              _
            // Predicated region
            $region57: #{tpu_custom_call.1} parent=51 // pred_check
              _
            $region58: #{tpu_custom_call.1} parent=51 // pred_check_branch
              %496 = sbr.rel target = $region60
            $region59: #{tpu_custom_call.1} parent=51 // pred_region
              %s498 = ssub.s32 256, 1
              %s499 = sshrl.u32 %s485, 1
              // While loop
              $region61: #{tpu_custom_call.1} parent=59 // loop_pre_header
                _
              $region62: #{tpu_custom_call.1} parent=59 // loop_header
                %s501 = sphi 0, %s503
                %p502 = scmp.ge.s32.totalorder %s501, %s499
                %s506 = sphi 0, %s515
                %s507 = sphi %s478, %s518
                %s508 = sphi %s489, %s519
              $region63: #{tpu_custom_call.1} parent=59 // loop_header_branch
                %505 = sbr.rel (%p502) target = $region67
              $region64: #{tpu_custom_call.1} parent=59 // loop_body
                %v509 = vld [vmem:[%s507] sm:%s498]
                %510 = vst [vmem:[%s508] sm:%s498] %v509
                %v511 = vld [vmem:[%s507 + $0x8] sm:%s498]
                %512 = vst [vmem:[%s508 + $0x8] sm:%s498] %v511
                %s513 = sadd.s32 1, %s506
                %p514 = scmp.ge.s32.totalorder %s513, %s499
                %s515 = scalar_select %p514, 0, %s513
                %s516 = smul.u32 %s515, 16
                %s517 = smul.u32 %s515, 16
                %s518 = scalar_lea.vmem %s478, %s516 [#allocation4]
                %s519 = scalar_lea.vmem %s489, %s517
              $region65: #{tpu_custom_call.1} parent=59 // loop_footer
                %s503 = sadd.s32 %s501, 1
              $region66: #{tpu_custom_call.1} parent=59 // loop_footer_branch
                %500 = sbr.rel target = $region62
              $region67: #{tpu_custom_call.1} parent=59 // loop_exit
                _
              %s520 = sshrl.u32 %s485, 1
              %s521 = sand.u32 %s485, 1
              %s522 = smul.u32 %s520, 2
              %s523 = smul.u32 8, %s522
              %s524 = scalar_lea.vmem %s478, %s523 [#allocation4]
              %s525 = smul.u32 8, %s522
              %s526 = scalar_lea.vmem %s489, %s525
              // While loop
              $region68: #{tpu_custom_call.1} parent=59 // loop_pre_header
                _
              $region69: #{tpu_custom_call.1} parent=59 // loop_header
                %s528 = sphi 0, %s530
                %p529 = scmp.ge.s32.totalorder %s528, %s521
                %s533 = sphi 0, %s540
                %s534 = sphi %s524, %s543
                %s535 = sphi %s526, %s544
              $region70: #{tpu_custom_call.1} parent=59 // loop_header_branch
                %532 = sbr.rel (%p529) target = $region74
              $region71: #{tpu_custom_call.1} parent=59 // loop_body
                %v536 = vld [vmem:[%s534] sm:%s498]
                %537 = vst [vmem:[%s535] sm:%s498] %v536
                %s538 = sadd.s32 1, %s533
                %p539 = scmp.ge.s32.totalorder %s538, %s521
                %s540 = scalar_select %p539, 0, %s538
                %s541 = smul.u32 %s540, 8
                %s542 = smul.u32 %s540, 8
                %s543 = scalar_lea.vmem %s524, %s541 [#allocation4]
                %s544 = scalar_lea.vmem %s526, %s542
              $region72: #{tpu_custom_call.1} parent=59 // loop_footer
                %s530 = sadd.s32 %s528, 1
              $region73: #{tpu_custom_call.1} parent=59 // loop_footer_branch
                %527 = sbr.rel target = $region69
              $region74: #{tpu_custom_call.1} parent=59 // loop_exit
                _
            $region60: #{tpu_custom_call.1} parent=51 // pred_fallthru
              _
          $region52: #{tpu_custom_call.1} parent=47 // pred_fallthru
            _
          %595 = vnop
        $region48: #{tpu_custom_call.1} parent=39 // pred_fallthru
          _
      $region40: #{tpu_custom_call.1} parent=5 // pred_fallthru
        _
      %p596 = scmp.le.s32.totalorder 2, %s14
      // Predicated region
      $region97: #{tpu_custom_call.1} parent=5 // pred_check
        %p597 = pneg %p596
      $region98: #{tpu_custom_call.1} parent=5 // pred_check_branch
        %599 = sbr.rel (%p597) target = $region100
      $region99: #{tpu_custom_call.1} parent=5 // pred_region
        %s600 = ssub.s32 %s14, 2
        // Predicated region
        $region101: #{tpu_custom_call.1} parent=99 // pred_check
          %p601 = pneg %p153
        $region102: #{tpu_custom_call.1} parent=99 // pred_check_branch
          %603 = sbr.rel (%p601) target = $region104
        $region103: #{tpu_custom_call.1} parent=99 // pred_region
          %s604 = sand.u32 %s138, 1
          %s605 = sand.u32 %s138, 1
          %s606 = smul.addr %s605, 16
          %s607 = scalar_lea.vmem [#allocation4], %s606
        $region104: #{tpu_custom_call.1} parent=99 // pred_fallthru
          _
      $region100: #{tpu_custom_call.1} parent=5 // pred_fallthru
        _
    $region6: #{tpu_custom_call.1} parent=1 // loop_footer
      %s18 = sadd.s32 1, %s14
    $region7: #{tpu_custom_call.1} parent=1 // loop_footer_branch
      %13 = sbr.rel target = $region3
    $region8: #{tpu_custom_call.1} parent=1 // loop_exit
      _
    %608 = vsyncpa [#allocation3], 1
    %s609 = scalar_lea.sflag [#allocation3], 1
    %610 = vsyncpa %s609, 1

</llo_original>
